<compile_context>
chip_gen: v5e
topology: v5e:2x2
jax: 0.10.0
libtpu: 0.0.40
codegen_flags: <defaults>
</compile_context>

<pallas_src>
import jax
import jax.numpy as jnp
from jax.experimental import pallas as pl
from jax.experimental.pallas import tpu as pltpu

LANE = 128
SUBLANE = 8


def _round_up(n, m):
    return ((n + m - 1) // m) * m


def clip_projector_kernel(pooled_ref, w_ref, b_ref, out_ref):
    # pooled_ref: (TB, K_pad)     bf16 token-mean-pooled patch pixels (batch tile)
    # w_ref:      (K_pad, Dp_pad) bf16 fused weight  (We @ Wp scaled, zero-padded)
    # b_ref:      (1, Dp_pad)     f32  fused bias    (be @ Wp + bp, zero-padded)
    # out_ref:    (TB, Dp_pad)    f32  lane-dense output tile
    out_ref[...] = (
        jnp.dot(pooled_ref[...], w_ref[...], preferred_element_type=jnp.float32)
        + b_ref[...]
    )


def _projector_pallas_call(pooled_bf16, w_bf16, b_f32, *, TB, single_buffer_weights):
    B_pad, K_pad = pooled_bf16.shape
    Dp_pad = w_bf16.shape[1]
    # Grid-invariant weight/bias: single-buffer them (halves their VMEM
    # residency; matters at real CLIP sizes, especially v7x's 64 MiB VMEM).
    wb_kwargs = dict(pipeline_mode=pl.Buffered(1)) if single_buffer_weights else {}
    return pl.pallas_call(
        clip_projector_kernel,
        out_shape=jax.ShapeDtypeStruct((B_pad, Dp_pad), jnp.float32),
        grid_spec=pltpu.PrefetchScalarGridSpec(
            num_scalar_prefetch=0,
            grid=(B_pad // TB,),
            in_specs=[
                pl.BlockSpec((TB, K_pad), lambda b: (b, 0)),            # batch tile
                pl.BlockSpec((K_pad, Dp_pad), lambda b: (0, 0), **wb_kwargs),
                pl.BlockSpec((1, Dp_pad), lambda b: (0, 0), **wb_kwargs),
            ],
            out_specs=pl.BlockSpec((TB, Dp_pad), lambda b: (b, 0)),
        ),
        compiler_params=pltpu.CompilerParams(
            dimension_semantics=("parallel",),       # megacore sharding on v7x
            vmem_limit_bytes=32 * 1024 * 1024,       # safe on v5e/v6e/v7x; tiny kernel
        ),
    )(pooled_bf16, w_bf16, b_f32)


def clip_projector_forward(x, w_embed, b_embed, w_proj, b_proj, patch=4):
    """x: [B, C, H, W] float32 (NCHW, as in PyTorch)."""
    B, C, H, W = x.shape
    P = patch
    assert H % P == 0 and W % P == 0
    K = C * P * P
    Dp = w_proj.shape[1]

    # --- mean-pool commuted before patchify (exact linearity commute) ---
    # mean over tokens == mean over patch-grid positions (i, j); the trailing
    # (C, P, P) ordering matches the channel-major patchify used by the encoder.
    # No (B, T, K) transposed patch copy is materialized; XLA fuses this pass.
    pooled = x.reshape(B, C, H // P, P, W // P, P).mean(axis=(2, 4)).reshape(B, K)

    # --- one-time algebraic fusion of the two linear layers (f32, setup-time) ---
    #   out = mean_T(patches) @ (We @ Wp) + (be @ Wp + bp)
    # TODO(synk): this fusion is only valid because the synthesized encoder is
    # purely linear (patch-embed + mean-pool); a real CLIP image encoder
    # (LayerNorm/attention/GELU/CLS) is nonlinear and would need its own
    # kernels for encode_image instead of this algebraic fusion.
    w_comb = w_embed @ w_proj                      # (K, Dp)
    b_comb = b_embed @ w_proj + b_proj             # (Dp,)

    # --- lane-align both matmul dims: contraction K and output Dp -> x128 ---
    K_pad = _round_up(K, LANE)
    Dp_pad = _round_up(Dp, LANE)
    pooled = jnp.pad(pooled, ((0, 0), (0, K_pad - K)))
    w_comb = jnp.pad(w_comb, ((0, K_pad - K), (0, Dp_pad - Dp)))
    b_comb = jnp.pad(b_comb, ((0, Dp_pad - Dp),)).reshape(1, Dp_pad)

    # --- batch tiling: sublane-aligned (>=8); >=2 grid steps when B is big
    # enough so the "parallel" axis can shard across v7x's two TensorCores ---
    B8 = _round_up(B, SUBLANE)
    if B8 <= 2 * SUBLANE:
        TB = B8                                    # too small to split usefully
    else:
        TB = min(128, _round_up(pl.cdiv(B8, 2), SUBLANE))
    B_pad = _round_up(B8, TB)
    if B_pad != B:
        pooled = jnp.pad(pooled, ((0, B_pad - B), (0, 0)))

    # bf16 MXU operands, f32 accumulation in-kernel; bias/output stay f32.
    pooled_bf16 = pooled.astype(jnp.bfloat16)
    w_comb_bf16 = w_comb.astype(jnp.bfloat16)
    b_comb_f32 = b_comb.astype(jnp.float32)

    try:
        out = _projector_pallas_call(pooled_bf16, w_comb_bf16, b_comb_f32,
                                     TB=TB, single_buffer_weights=True)
    except Exception:
        # Fallback if this JAX build rejects pl.Buffered(1) at top-level
        # pallas_call: default double-buffering is correct, just uses more VMEM.
        out = _projector_pallas_call(pooled_bf16, w_comb_bf16, b_comb_f32,
                                     TB=TB, single_buffer_weights=False)

    return out[:B, :Dp]


def _reference(x, w_embed, b_embed, w_proj, b_proj, patch=4):
    """Pure-JAX f32 reference matching the module semantics."""
    B, C, H, W = x.shape
    P = patch
    T = (H // P) * (W // P)
    K = C * P * P
    patches = x.reshape(B, C, H // P, P, W // P, P)
    patches = patches.transpose(0, 2, 4, 1, 3, 5).reshape(B, T, K)
    tokens = patches @ w_embed + b_embed[None, None, :]
    feat = tokens.mean(axis=1)
    return feat @ w_proj + b_proj[None, :]


if __name__ == "__main__":
    # Small, deterministic example shapes.
    B, C, H, W = 2, 4, 16, 16        # input image, NCHW
    P = 4                            # patch size -> T = 16 tokens, K = 64
    D_ENC = 32                       # encoder embedding dim
    D_PROJ = 32                      # projector output dim

    key = jax.random.PRNGKey(0)
    kx, kwe, kbe, kwp, kbp = jax.random.split(key, 5)

    x = jax.random.normal(kx, (B, C, H, W), dtype=jnp.float32)
    K = C * P * P
    w_embed = jax.random.normal(kwe, (K, D_ENC), dtype=jnp.float32) * 0.05
    b_embed = jax.random.normal(kbe, (D_ENC,), dtype=jnp.float32) * 0.05
    w_proj = jax.random.normal(kwp, (D_ENC, D_PROJ), dtype=jnp.float32) * 0.05
    b_proj = jax.random.normal(kbp, (D_PROJ,), dtype=jnp.float32) * 0.05

    out = clip_projector_forward(x, w_embed, b_embed, w_proj, b_proj, patch=P)
    out = jax.block_until_ready(out)

    ref = _reference(x, w_embed, b_embed, w_proj, b_proj, patch=P)
    assert out.shape == (B, D_PROJ)
    # Tolerance relaxed vs. pure-f32 because the kernel feeds the MXU bf16
    # operands (f32 accumulation); observed error is O(1e-4) at these scales.
    assert jnp.allclose(out, ref, atol=2e-2, rtol=2e-2), "Pallas output mismatch vs reference"

    print("KERNEL_OK")
</pallas_src>

<mosaic_0001>
module attributes {stable_mosaic.version = 11 : i64} {
  func.func @clip_projector_kernel(%arg0: i32, %arg1: memref<8x128xbf16, #tpu.memory_space<vmem>>, %arg2: memref<128x128xbf16, #tpu.memory_space<vmem>>, %arg3: memref<1x128xf32, #tpu.memory_space<vmem>>, %arg4: memref<8x128xf32, #tpu.memory_space<vmem>>) attributes {dimension_semantics = [#tpu.dimension_semantics<parallel>], iteration_bounds = array<i64: 1>, scalar_prefetch = 0 : i64, scratch_operands = 0 : i64, tpu.core_type = #tpu.core_type<tc>, window_params = [{transform_indices = @transform_0, window_bounds = array<i64: 8, 128>}, {pipeline_mode = #tpu.pipeline_mode<synchronous>, transform_indices = @transform_1, window_bounds = array<i64: 128, 128>}, {pipeline_mode = #tpu.pipeline_mode<synchronous>, transform_indices = @transform_2, window_bounds = array<i64: 1, 128>}, {transform_indices = @transform_3, window_bounds = array<i64: 8, 128>}]} {
    %c0 = arith.constant 0 : index
    %c0_0 = arith.constant 0 : index
    %0 = vector.load %arg1[%c0, %c0_0] : memref<8x128xbf16, #tpu.memory_space<vmem>>, vector<8x128xbf16>
    %c0_1 = arith.constant 0 : index
    %c0_2 = arith.constant 0 : index
    %1 = vector.load %arg2[%c0_1, %c0_2] : memref<128x128xbf16, #tpu.memory_space<vmem>>, vector<128x128xbf16>
    %cst = arith.constant dense<0.000000e+00> : vector<8x128xf32>
    %2 = tpu.matmul %0, %1, %cst {dimension_numbers = #tpu.dot_dimension_numbers<[1], [0], [0], [1], [0, 0, 1, 1], [], []>} : vector<8x128xbf16>, vector<128x128xbf16>, vector<8x128xf32> -> vector<8x128xf32>
    %c0_3 = arith.constant 0 : index
    %c0_4 = arith.constant 0 : index
    %3 = vector.load %arg3[%c0_3, %c0_4] : memref<1x128xf32, #tpu.memory_space<vmem>>, vector<1x128xf32>
    %4 = vector.broadcast %3 : vector<1x128xf32> to vector<8x128xf32>
    %5 = arith.addf %2, %4 : vector<8x128xf32>
    %c0_5 = arith.constant 0 : index
    %c0_6 = arith.constant 0 : index
    %6 = vector.load %arg4[%c0_5, %c0_6] : memref<8x128xf32, #tpu.memory_space<vmem>>, vector<8x128xf32>
    tpu.vector_store %arg4[%c0_5, %c0_6], %5 {strides = array<i32>} : memref<8x128xf32, #tpu.memory_space<vmem>>, vector<8x128xf32>,
    return
  }
  func.func @transform_0(%arg0: i32) -> (i32, i32) {
    %c0_i32 = arith.constant 0 : i32
    %c0_i32_0 = arith.constant 0 : i32
    return %arg0, %c0_i32 : i32, i32
  }
  func.func @transform_1(%arg0: i32) -> (i32, i32) {
    %c0_i32 = arith.constant 0 : i32
    %c0_i32_0 = arith.constant 0 : i32
    %c0_i32_1 = arith.constant 0 : i32
    return %c0_i32, %c0_i32_0 : i32, i32
  }
  func.func @transform_2(%arg0: i32) -> (i32, i32) {
    %c0_i32 = arith.constant 0 : i32
    %c0_i32_0 = arith.constant 0 : i32
    %c0_i32_1 = arith.constant 0 : i32
    return %c0_i32, %c0_i32_0 : i32, i32
  }
  func.func @transform_3(%arg0: i32) -> (i32, i32) {
    %c0_i32 = arith.constant 0 : i32
    %c0_i32_0 = arith.constant 0 : i32
    return %arg0, %c0_i32 : i32, i32
  }
}

module attributes {stable_mosaic.version = 11 : i64} {
  func.func @clip_projector_kernel(%arg0: i32, %arg1: memref<8x128xbf16, #tpu.memory_space<vmem>>, %arg2: memref<128x128xbf16, #tpu.memory_space<vmem>>, %arg3: memref<1x128xf32, #tpu.memory_space<vmem>>, %arg4: memref<8x128xf32, #tpu.memory_space<vmem>>) attributes {dimension_semantics = [#tpu.dimension_semantics<parallel>], iteration_bounds = array<i64: 1>, scalar_prefetch = 0 : i64, scratch_operands = 0 : i64, tpu.core_type = #tpu.core_type<tc>, window_params = [{transform_indices = @transform_0, window_bounds = array<i64: 8, 128>}, {pipeline_mode = #tpu.pipeline_mode<synchronous>, transform_indices = @transform_1, window_bounds = array<i64: 128, 128>}, {pipeline_mode = #tpu.pipeline_mode<synchronous>, transform_indices = @transform_2, window_bounds = array<i64: 1, 128>}, {transform_indices = @transform_3, window_bounds = array<i64: 8, 128>}]} {
    %c0 = arith.constant 0 : index
    %c0_0 = arith.constant 0 : index
    %0 = vector.load %arg1[%c0, %c0_0] : memref<8x128xbf16, #tpu.memory_space<vmem>>, vector<8x128xbf16>
    %c0_1 = arith.constant 0 : index
    %c0_2 = arith.constant 0 : index
    %1 = vector.load %arg2[%c0_1, %c0_2] : memref<128x128xbf16, #tpu.memory_space<vmem>>, vector<128x128xbf16>
    %cst = arith.constant dense<0.000000e+00> : vector<8x128xf32>
    %2 = tpu.matmul %0, %1, %cst {dimension_numbers = #tpu.dot_dimension_numbers<[1], [0], [0], [1], [0, 0, 1, 1], [], []>} : vector<8x128xbf16>, vector<128x128xbf16>, vector<8x128xf32> -> vector<8x128xf32>
    %c0_3 = arith.constant 0 : index
    %c0_4 = arith.constant 0 : index
    %3 = vector.load %arg3[%c0_3, %c0_4] : memref<1x128xf32, #tpu.memory_space<vmem>>, vector<1x128xf32>
    %4 = vector.broadcast %3 : vector<1x128xf32> to vector<8x128xf32>
    %5 = arith.addf %2, %4 : vector<8x128xf32>
    %c0_5 = arith.constant 0 : index
    %c0_6 = arith.constant 0 : index
    %6 = vector.load %arg4[%c0_5, %c0_6] : memref<8x128xf32, #tpu.memory_space<vmem>>, vector<8x128xf32>
    tpu.vector_store %arg4[%c0_5, %c0_6], %5 {strides = array<i32>} : memref<8x128xf32, #tpu.memory_space<vmem>>, vector<8x128xf32>,
    return
  }
  func.func @transform_0(%arg0: i32) -> (i32, i32) {
    %c0_i32 = arith.constant 0 : i32
    %c0_i32_0 = arith.constant 0 : i32
    return %arg0, %c0_i32 : i32, i32
  }
  func.func @transform_1(%arg0: i32) -> (i32, i32) {
    %c0_i32 = arith.constant 0 : i32
    %c0_i32_0 = arith.constant 0 : i32
    %c0_i32_1 = arith.constant 0 : i32
    return %c0_i32, %c0_i32_0 : i32, i32
  }
  func.func @transform_2(%arg0: i32) -> (i32, i32) {
    %c0_i32 = arith.constant 0 : i32
    %c0_i32_0 = arith.constant 0 : i32
    %c0_i32_1 = arith.constant 0 : i32
    return %c0_i32, %c0_i32_0 : i32, i32
  }
  func.func @transform_3(%arg0: i32) -> (i32, i32) {
    %c0_i32 = arith.constant 0 : i32
    %c0_i32_0 = arith.constant 0 : i32
    return %arg0, %c0_i32 : i32, i32
  }
}

</mosaic_0001>

<llo_original>
// kernel: tpu_custom_call.1
$region0: #{tpu_custom_call.1}
  #allocation0 [shape = 'u32[]', space=smem, size = 0x4, offset = 0x4, fixed_abs, tag = 'smem constant byte address 0x4 - core index']
  #allocation1 [shape = 'u32[72,128]{1,0:T(1,128)}', space=vmem, size = 0x9000, scoped, tag = 'internal scratch']
  %s0 = inlined_call_operand.hbm [shape: bf16[8,128], index: 0, kind: input, shape index: {}]
  %s1 = inlined_call_operand.hbm [shape: bf16[128,128], index: 1, kind: input, shape index: {}]
  %s2 = inlined_call_operand.vmem [shape: f32[1,128], index: 2, kind: input, shape index: {}]
  %s3 = inlined_call_operand.hbm [shape: f32[8,128], index: 3, kind: output, shape index: {}]
  %s4 = sld [smem:[#allocation0]]
  $region30: #{tpu_custom_call.1} parent=0
    _
  %s6 = ssub.s32 1, %s4
  %s7 = scalar_select 0, %s6, %s4
  $region1: #{tpu_custom_call.1} parent=0
    #allocation2 [shape = 'u8[2048]{0}', space=vmem, size = 0x800, scoped, tag = 'input window, operand 0, single buffered']
    #allocation3 [shape = 's32[1]{0}', space=sflag, size = 0x4, scoped, tag = 'scoped memory for tpu_custom_call.1']
    #allocation4 [shape = 's32[1]{0}', space=sflag, size = 0x4, scoped, tag = 'scoped memory for tpu_custom_call.1']
    #allocation5 [shape = 'u8[32768]{0}', space=vmem, size = 0x8000, scoped, tag = 'input window, operand 1, single buffered']
    #allocation6 [shape = 's32[1]{0}', space=sflag, size = 0x4, scoped, tag = 'scoped memory for tpu_custom_call.1']
    #allocation7 [shape = 'u8[4096]{0}', space=vmem, size = 0x1000, scoped, tag = 'output window, operand 0, single buffered']
    %8 = vsyncpa [#allocation3], 0
    %9 = vsyncpa [#allocation6], 0
    %10 = vsyncpa [#allocation4], 0
    // Predicated region
    $region2: #{tpu_custom_call.1} parent=1 // pred_check
      _
    $region3: #{tpu_custom_call.1} parent=1 // pred_check_branch
      %12 = sbr.rel (0) target = $region5
    $region4: #{tpu_custom_call.1} parent=1 // pred_region
      %14 = vsyncadd [#allocation3], 0
      %s16 = sshll.u32 %s0, 4
      %s17 = int_to_ptr.hbm [resolvable:$true] %s16
      %s18 = sshll.u32 [#allocation2], 4
      %s19 = int_to_ptr.vmem [resolvable:$true] %s18
      %21 = dma.hbm_to_vmem [thread:$0]  %s17, 64, %s19, [#allocation3]
    $region5: #{tpu_custom_call.1} parent=1 // pred_fallthru
      _
    // Predicated region
    $region6: #{tpu_custom_call.1} parent=1 // pred_check
      _
    $region7: #{tpu_custom_call.1} parent=1 // pred_check_branch
      %23 = sbr.rel (0) target = $region9
    $region8: #{tpu_custom_call.1} parent=1 // pred_region
      %25 = vsyncadd [#allocation6], 0
      %s26 = sshll.u32 %s1, 4
      %s27 = int_to_ptr.hbm [resolvable:$true] %s26
      %s28 = sshll.u32 [#allocation5], 4
      %s29 = int_to_ptr.vmem [resolvable:$true] %s28
      %34 = dma.hbm_to_vmem [thread:$0]  %s27, 1024, %s29, [#allocation6], 64, 64, 4
    $region9: #{tpu_custom_call.1} parent=1 // pred_fallthru
      _
    // Predicated region
    $region10: #{tpu_custom_call.1} parent=1 // pred_check
      _
    $region11: #{tpu_custom_call.1} parent=1 // pred_check_branch
      %36 = sbr.rel (0) target = $region13
    $region12: #{tpu_custom_call.1} parent=1 // pred_region
      _
    $region13: #{tpu_custom_call.1} parent=1 // pred_fallthru
      _
    // Predicated region
    $region14: #{tpu_custom_call.1} parent=1 // pred_check
      _
    $region15: #{tpu_custom_call.1} parent=1 // pred_check_branch
      %38 = sbr.rel (0) target = $region17
    $region16: #{tpu_custom_call.1} parent=1 // pred_region
      %40 = dma.done [#allocation3], 64
    $region17: #{tpu_custom_call.1} parent=1 // pred_fallthru
      _
    // Predicated region
    $region18: #{tpu_custom_call.1} parent=1 // pred_check
      _
    $region19: #{tpu_custom_call.1} parent=1 // pred_check_branch
      %42 = sbr.rel (0) target = $region21
    $region20: #{tpu_custom_call.1} parent=1 // pred_region
      %44 = dma.done [#allocation6], 1024
    $region21: #{tpu_custom_call.1} parent=1 // pred_fallthru
      _
    %v45 = vld [vmem:[#allocation2] sm:$0xf]
    %v46 = vld [vmem:[#allocation5] sm:$0xf]
    %v47 = vld [vmem:[#allocation5 + $0x4] sm:$0xf]
    %v48 = vld [vmem:[#allocation5 + $0x8] sm:$0xf]
    %v49 = vld [vmem:[#allocation5 + $0xc] sm:$0xf]
    %v50 = vld [vmem:[#allocation5 + $0x10] sm:$0xf]
    %v51 = vld [vmem:[#allocation5 + $0x14] sm:$0xf]
    %v52 = vld [vmem:[#allocation5 + $0x18] sm:$0xf]
    %v53 = vld [vmem:[#allocation5 + $0x1c] sm:$0xf]
    %v54 = vld [vmem:[#allocation5 + $0x20] sm:$0xf]
    %v55 = vld [vmem:[#allocation5 + $0x24] sm:$0xf]
    %v56 = vld [vmem:[#allocation5 + $0x28] sm:$0xf]
    %v57 = vld [vmem:[#allocation5 + $0x2c] sm:$0xf]
    %v58 = vld [vmem:[#allocation5 + $0x30] sm:$0xf]
    %v59 = vld [vmem:[#allocation5 + $0x34] sm:$0xf]
    %v60 = vld [vmem:[#allocation5 + $0x38] sm:$0xf]
    %v61 = vld [vmem:[#allocation5 + $0x3c] sm:$0xf]
    %v62 = vld [vmem:[%s2] sm:$0x1]
    %v64 = vperm.slane %v62, 0
    %v82 = vunpack.c.l.b16 %v46
    %v83 = vunpack.c.l.b16 %v47
    %v84 = vunpack.c.l.b16 %v48
    %v85 = vunpack.c.l.b16 %v49
    %v86 = vunpack.c.l.b16 %v50
    %v87 = vunpack.c.l.b16 %v51
    %v88 = vunpack.c.l.b16 %v52
    %v89 = vunpack.c.l.b16 %v53
    %v90 = vunpack.c.l.b16 %v54
    %v91 = vunpack.c.l.b16 %v55
    %v92 = vunpack.c.l.b16 %v56
    %v93 = vunpack.c.l.b16 %v57
    %v94 = vunpack.c.l.b16 %v58
    %v95 = vunpack.c.l.b16 %v59
    %v96 = vunpack.c.l.b16 %v60
    %v97 = vunpack.c.l.b16 %v61
    %v98 = vpack.c.b16 %v83, %v82
    %v99 = vpack.c.b16 %v85, %v84
    %v100 = vpack.c.b16 %v87, %v86
    %v101 = vpack.c.b16 %v89, %v88
    %v102 = vpack.c.b16 %v91, %v90
    %v103 = vpack.c.b16 %v93, %v92
    %v104 = vpack.c.b16 %v95, %v94
    %v105 = vpack.c.b16 %v97, %v96
    %114 = vmatpush.bf16.msra.mxu0 %v105
    %115 = vmatpush.bf16.msra.mxu0 %v104
    %116 = vmatpush.bf16.msra.mxu0 %v103
    %117 = vmatpush.bf16.msra.mxu0 %v102
    %118 = vmatpush.bf16.msra.mxu0 %v101
    %119 = vmatpush.bf16.msra.mxu0 %v100
    %120 = vmatpush.bf16.msra.mxu0 %v99
    %121 = vmatpush.bf16.msra.mxu0 %v98
    %122 = vmatmul.bf16.gmra.mxu0 %v45
    %v123 = vpop.f32.mrf.mxu0
    %v124 = vadd.f32 %v64, %v123
    %v125 = vpop.f32.mrf.mxu0
    %126 = vdwg.mxu0
    %127 = vst [vmem:[#allocation7] sm:$0xff] %v124
    // Predicated region
    $region22: #{tpu_custom_call.1} parent=1 // pred_check
      _
    $region23: #{tpu_custom_call.1} parent=1 // pred_check_branch
      %129 = sbr.rel (0) target = $region25
    $region24: #{tpu_custom_call.1} parent=1 // pred_region
      %131 = vsyncadd [#allocation4], 0
      %s133 = sshll.u32 [#allocation7], 4
      %s134 = int_to_ptr.vmem [resolvable:$true] %s133
      %s135 = sshll.u32 %s3, 4
      %s136 = int_to_ptr.hbm [resolvable:$true] %s135
      %138 = dma.vmem_to_hbm [thread:$0]  %s134, 128, %s136, [#allocation4]
    $region25: #{tpu_custom_call.1} parent=1 // pred_fallthru
      _
    // Predicated region
    $region26: #{tpu_custom_call.1} parent=1 // pred_check
      _
    $region27: #{tpu_custom_call.1} parent=1 // pred_check_branch
      %140 = sbr.rel (0) target = $region29
    $region28: #{tpu_custom_call.1} parent=1 // pred_region
      %142 = dma.done [#allocation4], 128
    $region29: #{tpu_custom_call.1} parent=1 // pred_fallthru
      _
    %143 = vsyncpa [#allocation3], 1
    %144 = vsyncpa [#allocation6], 1
    %145 = vsyncpa [#allocation4], 1

// kernel: tpu_custom_call.1
$region0: #{tpu_custom_call.1}
  #allocation0 [shape = 'u32[]', space=smem, size = 0x4, offset = 0x4, fixed_abs, tag = 'smem constant byte address 0x4 - core index']
  #allocation1 [shape = 'u32[72,128]{1,0:T(1,128)}', space=vmem, size = 0x9000, scoped, tag = 'internal scratch']
  %s0 = inlined_call_operand.hbm [shape: bf16[8,128], index: 0, kind: input, shape index: {}]
  %s1 = inlined_call_operand.hbm [shape: bf16[128,128], index: 1, kind: input, shape index: {}]
  %s2 = inlined_call_operand.vmem [shape: f32[1,128], index: 2, kind: input, shape index: {}]
  %s3 = inlined_call_operand.hbm [shape: f32[8,128], index: 3, kind: output, shape index: {}]
  %s4 = sld [smem:[#allocation0]]
  $region30: #{tpu_custom_call.1} parent=0
    _
  %s6 = ssub.s32 1, %s4
  %s7 = scalar_select 0, %s6, %s4
  $region1: #{tpu_custom_call.1} parent=0
    #allocation2 [shape = 'u8[2048]{0}', space=vmem, size = 0x800, scoped, tag = 'input window, operand 0, single buffered']
    #allocation3 [shape = 's32[1]{0}', space=sflag, size = 0x4, scoped, tag = 'scoped memory for tpu_custom_call.1']
    #allocation4 [shape = 's32[1]{0}', space=sflag, size = 0x4, scoped, tag = 'scoped memory for tpu_custom_call.1']
    #allocation5 [shape = 'u8[32768]{0}', space=vmem, size = 0x8000, scoped, tag = 'input window, operand 1, single buffered']
    #allocation6 [shape = 's32[1]{0}', space=sflag, size = 0x4, scoped, tag = 'scoped memory for tpu_custom_call.1']
    #allocation7 [shape = 'u8[4096]{0}', space=vmem, size = 0x1000, scoped, tag = 'output window, operand 0, single buffered']
    %8 = vsyncpa [#allocation3], 0
    %9 = vsyncpa [#allocation6], 0
    %10 = vsyncpa [#allocation4], 0
    // Predicated region
    $region2: #{tpu_custom_call.1} parent=1 // pred_check
      _
    $region3: #{tpu_custom_call.1} parent=1 // pred_check_branch
      %12 = sbr.rel (0) target = $region5
    $region4: #{tpu_custom_call.1} parent=1 // pred_region
      %14 = vsyncadd [#allocation3], 0
      %s16 = sshll.u32 %s0, 4
      %s17 = int_to_ptr.hbm [resolvable:$true] %s16
      %s18 = sshll.u32 [#allocation2], 4
      %s19 = int_to_ptr.vmem [resolvable:$true] %s18
      %21 = dma.hbm_to_vmem [thread:$0]  %s17, 64, %s19, [#allocation3]
    $region5: #{tpu_custom_call.1} parent=1 // pred_fallthru
      _
    // Predicated region
    $region6: #{tpu_custom_call.1} parent=1 // pred_check
      _
    $region7: #{tpu_custom_call.1} parent=1 // pred_check_branch
      %23 = sbr.rel (0) target = $region9
    $region8: #{tpu_custom_call.1} parent=1 // pred_region
      %25 = vsyncadd [#allocation6], 0
      %s26 = sshll.u32 %s1, 4
      %s27 = int_to_ptr.hbm [resolvable:$true] %s26
      %s28 = sshll.u32 [#allocation5], 4
      %s29 = int_to_ptr.vmem [resolvable:$true] %s28
      %34 = dma.hbm_to_vmem [thread:$0]  %s27, 1024, %s29, [#allocation6], 64, 64, 4
    $region9: #{tpu_custom_call.1} parent=1 // pred_fallthru
      _
    // Predicated region
    $region10: #{tpu_custom_call.1} parent=1 // pred_check
      _
    $region11: #{tpu_custom_call.1} parent=1 // pred_check_branch
      %36 = sbr.rel (0) target = $region13
    $region12: #{tpu_custom_call.1} parent=1 // pred_region
      _
    $region13: #{tpu_custom_call.1} parent=1 // pred_fallthru
      _
    // Predicated region
    $region14: #{tpu_custom_call.1} parent=1 // pred_check
      _
    $region15: #{tpu_custom_call.1} parent=1 // pred_check_branch
      %38 = sbr.rel (0) target = $region17
    $region16: #{tpu_custom_call.1} parent=1 // pred_region
      %40 = dma.done [#allocation3], 64
    $region17: #{tpu_custom_call.1} parent=1 // pred_fallthru
      _
    // Predicated region
    $region18: #{tpu_custom_call.1} parent=1 // pred_check
      _
    $region19: #{tpu_custom_call.1} parent=1 // pred_check_branch
      %42 = sbr.rel (0) target = $region21
    $region20: #{tpu_custom_call.1} parent=1 // pred_region
      %44 = dma.done [#allocation6], 1024
    $region21: #{tpu_custom_call.1} parent=1 // pred_fallthru
      _
    %v45 = vld [vmem:[#allocation2] sm:$0xf]
    %v46 = vld [vmem:[#allocation5] sm:$0xf]
    %v47 = vld [vmem:[#allocation5 + $0x4] sm:$0xf]
    %v48 = vld [vmem:[#allocation5 + $0x8] sm:$0xf]
    %v49 = vld [vmem:[#allocation5 + $0xc] sm:$0xf]
    %v50 = vld [vmem:[#allocation5 + $0x10] sm:$0xf]
    %v51 = vld [vmem:[#allocation5 + $0x14] sm:$0xf]
    %v52 = vld [vmem:[#allocation5 + $0x18] sm:$0xf]
    %v53 = vld [vmem:[#allocation5 + $0x1c] sm:$0xf]
    %v54 = vld [vmem:[#allocation5 + $0x20] sm:$0xf]
    %v55 = vld [vmem:[#allocation5 + $0x24] sm:$0xf]
    %v56 = vld [vmem:[#allocation5 + $0x28] sm:$0xf]
    %v57 = vld [vmem:[#allocation5 + $0x2c] sm:$0xf]
    %v58 = vld [vmem:[#allocation5 + $0x30] sm:$0xf]
    %v59 = vld [vmem:[#allocation5 + $0x34] sm:$0xf]
    %v60 = vld [vmem:[#allocation5 + $0x38] sm:$0xf]
    %v61 = vld [vmem:[#allocation5 + $0x3c] sm:$0xf]
    %v62 = vld [vmem:[%s2] sm:$0x1]
    %v64 = vperm.slane %v62, 0
    %v82 = vunpack.c.l.b16 %v46
    %v83 = vunpack.c.l.b16 %v47
    %v84 = vunpack.c.l.b16 %v48
    %v85 = vunpack.c.l.b16 %v49
    %v86 = vunpack.c.l.b16 %v50
    %v87 = vunpack.c.l.b16 %v51
    %v88 = vunpack.c.l.b16 %v52
    %v89 = vunpack.c.l.b16 %v53
    %v90 = vunpack.c.l.b16 %v54
    %v91 = vunpack.c.l.b16 %v55
    %v92 = vunpack.c.l.b16 %v56
    %v93 = vunpack.c.l.b16 %v57
    %v94 = vunpack.c.l.b16 %v58
    %v95 = vunpack.c.l.b16 %v59
    %v96 = vunpack.c.l.b16 %v60
    %v97 = vunpack.c.l.b16 %v61
    %v98 = vpack.c.b16 %v83, %v82
    %v99 = vpack.c.b16 %v85, %v84
    %v100 = vpack.c.b16 %v87, %v86
    %v101 = vpack.c.b16 %v89, %v88
    %v102 = vpack.c.b16 %v91, %v90
    %v103 = vpack.c.b16 %v93, %v92
    %v104 = vpack.c.b16 %v95, %v94
    %v105 = vpack.c.b16 %v97, %v96
    %114 = vmatpush.bf16.msra.mxu0 %v105
    %115 = vmatpush.bf16.msra.mxu0 %v104
    %116 = vmatpush.bf16.msra.mxu0 %v103
    %117 = vmatpush.bf16.msra.mxu0 %v102
    %118 = vmatpush.bf16.msra.mxu0 %v101
    %119 = vmatpush.bf16.msra.mxu0 %v100
    %120 = vmatpush.bf16.msra.mxu0 %v99
    %121 = vmatpush.bf16.msra.mxu0 %v98
    %122 = vmatmul.bf16.gmra.mxu0 %v45
    %v123 = vpop.f32.mrf.mxu0
    %v124 = vadd.f32 %v64, %v123
    %v125 = vpop.f32.mrf.mxu0
    %126 = vdwg.mxu0
    %127 = vst [vmem:[#allocation7] sm:$0xff] %v124
    // Predicated region
    $region22: #{tpu_custom_call.1} parent=1 // pred_check
      _
    $region23: #{tpu_custom_call.1} parent=1 // pred_check_branch
      %129 = sbr.rel (0) target = $region25
    $region24: #{tpu_custom_call.1} parent=1 // pred_region
      %131 = vsyncadd [#allocation4], 0
      %s133 = sshll.u32 [#allocation7], 4
      %s134 = int_to_ptr.vmem [resolvable:$true] %s133
      %s135 = sshll.u32 %s3, 4
      %s136 = int_to_ptr.hbm [resolvable:$true] %s135
      %138 = dma.vmem_to_hbm [thread:$0]  %s134, 128, %s136, [#allocation4]
    $region25: #{tpu_custom_call.1} parent=1 // pred_fallthru
      _
    // Predicated region
    $region26: #{tpu_custom_call.1} parent=1 // pred_check
      _
    $region27: #{tpu_custom_call.1} parent=1 // pred_check_branch
      %140 = sbr.rel (0) target = $region29
    $region28: #{tpu_custom_call.1} parent=1 // pred_region
      %142 = dma.done [#allocation4], 128
    $region29: #{tpu_custom_call.1} parent=1 // pred_fallthru
      _
    %143 = vsyncpa [#allocation3], 1
    %144 = vsyncpa [#allocation6], 1
    %145 = vsyncpa [#allocation4], 1

</llo_original>
